<compile_context>
chip_gen: v7x
topology: tpu7x:2x2x1
jax: 0.10.0
libtpu: 0.0.40
codegen_flags: <defaults>
</compile_context>

<pallas_src>
import jax
import jax.numpy as jnp
from jax import lax
from jax.experimental import pallas as pl
from jax.experimental.pallas import tpu as pltpu

_LANE = 128


def _round_up(x, m):
    return ((x + m - 1) // m) * m


def _vmem_limits():
    """(tile budget, vmem_limit_bytes) derived from this generation's VMEM."""
    try:
        cap = pltpu.get_tpu_info().vmem_capacity_bytes   # 128 MiB v5e/v6e, 64 MiB v7x
    except Exception:                                    # fallback: v7x-safe default
        cap = 64 << 20
    return int(cap * 0.70), int(cap * 0.85)


def _choose_gene_tile(n_genes_p, n_hops, n_meta_p, budget_bytes):
    """Largest row tile whose FULL resident Call-A footprint fits the budget.

    Double-buffered by the pipeline:
      rs block     (n_hops, tm, n_genes_p)  bf16   (input)
      R_comb block (tm, n_genes_p)          bf16   (output)
      s_l block    (tm, n_meta_p)           f32    (output)
    Grid-invariant but still double-buffered by Pallas:
      lin_wt       (n_genes_p, n_meta_p)    bf16
      lin_b        (1, n_meta_p)            f32
    """
    resident = 2 * (n_genes_p * n_meta_p * 2 + 8 * n_meta_p * 4)
    avail = budget_bytes - resident - (2 << 20)          # slack for Mosaic scratch
    per_row = 2 * (n_hops * n_genes_p * 2 + n_genes_p * 2 + n_meta_p * 4)
    tm = max(avail, 0) // per_row
    tm = min(int(tm), 512, n_genes_p)
    if tm >= _LANE:
        return (tm // _LANE) * _LANE
    # Tight-VMEM fallback: a divisor of 128 keeps n_genes_p % tm == 0 and keeps
    # bf16 blocks on >=16 sublanes.
    for cand in (64, 32, 16):
        if tm >= cand:
            return cand
    return 16


# --------------------------- Call A: assignment ---------------------------

def _assign_kernel(w_ref, rs_ref, lin_wt_ref, lin_b_ref, rcomb_ref, sl_ref):
    i = pl.program_id(0)
    tm, ncols = rcomb_ref.shape
    n_hops = rs_ref.shape[0]

    w = w_ref[...]                                     # (1, n_hops+1) = softmax(weight)

    # R_comb tile = sum_{h>=1} w[h] * R^h  (rs stored bf16, accumulate in f32)
    acc = w[0, 1] * rs_ref[0].astype(jnp.float32)
    for h in range(1, n_hops):
        acc = acc + w[0, h + 1] * rs_ref[h].astype(jnp.float32)

    # Identity hop (R^0) without any DMA: add w[0] on the (global) diagonal.
    # (A (tm,tm)-windowed add would save a few full-width VPU ops, but needs a
    #  dynamic lane-dim slice store; the kernel is DMA-bound, so keep it simple.)
    rows = lax.broadcasted_iota(jnp.int32, (tm, ncols), 0) + i * tm
    cols = lax.broadcasted_iota(jnp.int32, (tm, ncols), 1)
    acc = acc + jnp.where(rows == cols, w[0, 0], jnp.float32(0.0))

    # bf16 writeback: Call A is HBM-bound, this is ~1/(n_hops+1) of the traffic.
    rcomb_ref[...] = acc.astype(rcomb_ref.dtype)

    # Row-normalize (EUP reciprocal), then Linear(n_genes -> n_meta) + softmax.
    inv = pl.reciprocal(jnp.sum(acc, axis=1, keepdims=True) + 1e-6, approx=True)
    rnorm = (acc * inv).astype(jnp.bfloat16)           # bf16 MXU operands, f32 accum
    logits = jnp.dot(rnorm, lin_wt_ref[...],
                     preferred_element_type=jnp.float32) + lin_b_ref[...]
    e = jnp.exp(logits - jnp.max(logits, axis=1, keepdims=True))
    sl_ref[...] = e * pl.reciprocal(jnp.sum(e, axis=1, keepdims=True), approx=True)


# --------------------------- Call B: expr pooling ---------------------------

def _expr_pool_kernel(expr_ref, sl_ref, out_ref):
    gi = pl.program_id(1)

    @pl.when(gi == 0)
    def _():
        out_ref[...] = jnp.zeros_like(out_ref)

    # Accumulate directly into the VMEM-resident output block (no scratch).
    out_ref[...] += jnp.dot(expr_ref[...],                       # bf16
                            sl_ref[...].astype(jnp.bfloat16),
                            preferred_element_type=jnp.float32)

    @pl.when(gi == pl.num_programs(1) - 1)
    def _():
        ep = out_ref[...]
        # Exact division here: the 1e5 scale amplifies errors before log1p.
        out_ref[...] = jnp.log1p(ep / (jnp.sum(ep, axis=1, keepdims=True) + 1e-4)
                                 * 1e5)


# --------------------------- Call C: gene pooling ---------------------------

def _gene_pool_kernel(sl_ref, emb_ref, out_ref):
    gi = pl.program_id(0)

    @pl.when(gi == 0)
    def _():
        out_ref[...] = jnp.zeros_like(out_ref)

    # gene_pool += s_l.T @ emb  (contract over the gene axis; no explicit .T)
    out_ref[...] += lax.dot_general(sl_ref[...].astype(jnp.bfloat16),
                                    emb_ref[...],                # bf16
                                    (((0,), (0,)), ((), ())),
                                    preferred_element_type=jnp.float32)


# ---------------- __init__-time glue (plain JAX, not hot-path) ----------------

def knn_graph_jax(features, k):
    """Binary symmetric kNN adjacency with self loops (mirrors torch knn_graph)."""
    n = features.shape[0]
    d2 = jnp.sum((features[:, None, :] - features[None, :, :]) ** 2, axis=-1)
    dist = jnp.sqrt(jnp.maximum(d2, 0.0))
    dist = dist + jnp.diag(jnp.full((n,), jnp.inf, jnp.float32))  # fill_diagonal_(inf)
    idx = jnp.argsort(dist, axis=1)[:, :k]                        # k smallest
    a = jnp.zeros((n, n), jnp.float32).at[jnp.arange(n)[:, None], idx].set(1.0)
    a = jnp.maximum(a, a.T) + jnp.eye(n, dtype=jnp.float32)
    return a


def genepool_init(gene_embed, k_neighs=10, n_hops=4, n_meta=256):
    """knn graph, R^1..R^n_hops and the static padded/bf16 kernel buffers (once)."""
    assert n_hops >= 1, "GenePoolRW Pallas kernel assumes n_hops >= 1"
    n_genes, d_embed = gene_embed.shape

    A = knn_graph_jax(gene_embed, k_neighs)
    R = A / (A.sum(axis=1, keepdims=True) + 1e-6)
    hops, Rk = [], R
    for _ in range(n_hops):
        hops.append(Rk)
        Rk = Rk @ R
    rs_hops = jnp.stack(hops, axis=0)               # (n_hops, N, N) = R^1..R^n_hops

    n_genes_p0 = _round_up(n_genes, _LANE)
    n_meta_p = _round_up(n_meta, _LANE)
    d_embed_p = _round_up(d_embed, _LANE)
    tile_budget, vmem_limit = _vmem_limits()
    tm = _choose_gene_tile(n_genes_p0, n_hops, n_meta_p, tile_budget)
    n_genes_p = _round_up(n_genes_p0, tm)
    pg = n_genes_p - n_genes

    # bf16 BEFORE pad: no n_hops*n_genes_p^2 f32 temporary, done once at init.
    rs_p = jnp.pad(rs_hops.astype(jnp.bfloat16), ((0, 0), (0, pg), (0, pg)))
    emb_p = jnp.pad(gene_embed.astype(jnp.bfloat16),
                    ((0, pg), (0, d_embed_p - d_embed)))

    return dict(rs=rs_p, emb=emb_p, n_genes=n_genes, n_hops=n_hops, n_meta=n_meta,
                d_embed=d_embed, n_genes_p=n_genes_p, n_meta_p=n_meta_p,
                d_embed_p=d_embed_p, tm=tm, vmem_limit=vmem_limit)


# --------------------------- host-side forward ---------------------------

def genepool_forward(params, weight, lin_w, lin_b, expr):
    """Pallas implementation of GenePoolRW.forward(expr, log_norm=True)."""
    n_genes, n_hops = params["n_genes"], params["n_hops"]
    n_meta, d_embed = params["n_meta"], params["d_embed"]
    n_genes_p, n_meta_p = params["n_genes_p"], params["n_meta_p"]
    d_embed_p, tm = params["d_embed_p"], params["tm"]
    vmem_limit = params["vmem_limit"]
    rs_p, emb_p = params["rs"], params["emb"]

    n_cells = expr.shape[0]
    n_tiles = n_genes_p // tm
    pg = n_genes_p - n_genes

    # Hop softmax is O(n_hops): compute once here, not per grid step.
    w2d = jax.nn.softmax(weight.astype(jnp.float32)).reshape(1, n_hops + 1)
    # Learned params change during training -> re-padded per forward (cheap,
    # bf16 before pad).  Padded meta biases = -1e30 so their softmax is 0.
    lin_wt_p = jnp.pad(lin_w.T.astype(jnp.bfloat16),
                       ((0, pg), (0, n_meta_p - n_meta)))
    lin_b_p = jnp.concatenate(
        [lin_b.astype(jnp.float32),
         jnp.full((n_meta_p - n_meta,), -1e30, jnp.float32)]).reshape(1, n_meta_p)

    # --- Call A: hop combine + row-norm + Linear/softmax (parallel over rows)
    cost_a = pl.CostEstimate(
        flops=int(2 * n_genes_p * n_genes_p * (n_hops + n_meta_p)),
        transcendentals=int(n_genes_p * (n_meta_p + 2)),
        bytes_accessed=int((n_hops + 1) * n_genes_p * n_genes_p * 2
                           + n_genes_p * n_meta_p * 6))

    rcomb_p, sl_p = pl.pallas_call(
        _assign_kernel,
        out_shape=(jax.ShapeDtypeStruct((n_genes_p, n_genes_p), jnp.bfloat16),
                   jax.ShapeDtypeStruct((n_genes_p, n_meta_p), jnp.float32)),
        grid=(n_tiles,),
        in_specs=[
            pl.BlockSpec((1, n_hops + 1), lambda i: (0, 0)),
            pl.BlockSpec((n_hops, tm, n_genes_p), lambda i: (0, i, 0)),
            pl.BlockSpec((n_genes_p, n_meta_p), lambda i: (0, 0)),
            pl.BlockSpec((1, n_meta_p), lambda i: (0, 0)),
        ],
        out_specs=(pl.BlockSpec((tm, n_genes_p), lambda i: (i, 0)),
                   pl.BlockSpec((tm, n_meta_p), lambda i: (i, 0))),
        compiler_params=pltpu.CompilerParams(
            dimension_semantics=("parallel",),
            vmem_limit_bytes=vmem_limit),
        cost_estimate=cost_a,
    )(w2d, rs_p, lin_wt_p, lin_b_p)

    # --- Pooling tile sizes (decoupled from Call A's tm; always lane-aligned)
    n_cells_p = _round_up(n_cells, 16)
    tc = n_cells_p if n_cells_p <= 256 else 256
    n_cells_p = _round_up(n_cells_p, tc)
    n_ctiles = n_cells_p // tc
    expr_p = jnp.pad(expr.astype(jnp.bfloat16),
                     ((0, n_cells_p - n_cells), (0, pg)))

    tmb = _LANE
    for cand in (2048, 1024, 512, 256):
        if n_genes_p % cand == 0:
            tmb = cand
            break
    n_gtiles = n_genes_p // tmb

    # --- Call B: expr_pool = expr @ s_l (+ log-norm), accumulate in the output
    cost_b = pl.CostEstimate(
        flops=int(2 * n_cells_p * n_genes_p * n_meta_p),
        transcendentals=int(n_cells_p * n_meta_p),
        bytes_accessed=int(n_cells_p * n_genes_p * 2 + n_genes_p * n_meta_p * 4
                           + n_cells_p * n_meta_p * 4))

    expr_pool_p = pl.pallas_call(
        _expr_pool_kernel,
        out_shape=jax.ShapeDtypeStruct((n_cells_p, n_meta_p), jnp.float32),
        grid=(n_ctiles, n_gtiles),
        in_specs=[
            pl.BlockSpec((tc, tmb), lambda ci, gi: (ci, gi)),
            pl.BlockSpec((tmb, n_meta_p), lambda ci, gi: (gi, 0)),
        ],
        out_specs=pl.BlockSpec((tc, n_meta_p), lambda ci, gi: (ci, 0)),
        compiler_params=pltpu.CompilerParams(
            dimension_semantics=("parallel", "arbitrary"),
            vmem_limit_bytes=vmem_limit),
        cost_estimate=cost_b,
    )(expr_p, sl_p)

    # --- Call C: gene_pool = s_l.T @ gene_embed, accumulate in the output
    cost_c = pl.CostEstimate(
        flops=int(2 * n_genes_p * n_meta_p * d_embed_p),
        transcendentals=0,
        bytes_accessed=int(n_genes_p * n_meta_p * 4 + n_genes_p * d_embed_p * 2
                           + n_meta_p * d_embed_p * 4))

    gene_pool_p = pl.pallas_call(
        _gene_pool_kernel,
        out_shape=jax.ShapeDtypeStruct((n_meta_p, d_embed_p), jnp.float32),
        grid=(n_gtiles,),
        in_specs=[
            pl.BlockSpec((tmb, n_meta_p), lambda gi: (gi, 0)),
            pl.BlockSpec((tmb, d_embed_p), lambda gi: (gi, 0)),
        ],
        out_specs=pl.BlockSpec((n_meta_p, d_embed_p), lambda gi: (0, 0)),
        compiler_params=pltpu.CompilerParams(
            dimension_semantics=("arbitrary",),
            vmem_limit_bytes=vmem_limit),
        cost_estimate=cost_c,
    )(sl_p, emb_p)

    # Slice the lane/row padding back off (upcast the bf16 R_comb writeback).
    return (rcomb_p[:n_genes, :n_genes].astype(jnp.float32),
            sl_p[:n_genes, :n_meta],
            expr_pool_p[:n_cells, :n_meta],
            gene_pool_p[:n_meta, :d_embed])


if __name__ == "__main__":
    N_GENES, D_EMBED, N_META, N_HOPS, K_NEIGH, N_CELLS = 32, 16, 16, 3, 4, 4

    key = jax.random.PRNGKey(0)
    k1, k2, k3, k4, k5 = jax.random.split(key, 5)

    gene_embed = jax.random.normal(k1, (N_GENES, D_EMBED), jnp.float32)
    weight = jax.random.normal(k2, (N_HOPS + 1,), jnp.float32)     # nn.Parameter(randn)
    bound = 1.0 / (N_GENES ** 0.5)                                 # Linear default init
    lin_w = jax.random.uniform(k3, (N_META, N_GENES), jnp.float32, -bound, bound)
    lin_b = jax.random.uniform(k4, (N_META,), jnp.float32, -bound, bound)
    expr = jax.random.uniform(k5, (N_CELLS, N_GENES), jnp.float32, 0.0, 10.0)

    params = genepool_init(gene_embed, k_neighs=K_NEIGH, n_hops=N_HOPS, n_meta=N_META)

    outs = jax.block_until_ready(
        genepool_forward(params, weight, lin_w, lin_b, expr))
    R_comb_k, sl_k, ep_k, gp_k = outs

    # Plain-JAX reference using the same bf16-quantized buffers the kernels read
    # (R^h, expr, gene_embed), everything else in f32.
    rs_q = params["rs"][:, :N_GENES, :N_GENES].astype(jnp.float32)
    emb_q = gene_embed.astype(jnp.bfloat16).astype(jnp.float32)
    expr_q = expr.astype(jnp.bfloat16).astype(jnp.float32)
    w_rw = jax.nn.softmax(weight)
    R_comb_ref = w_rw[0] * jnp.eye(N_GENES, dtype=jnp.float32) \
        + jnp.sum(w_rw[1:, None, None] * rs_q, axis=0)
    R_norm_ref = R_comb_ref / (R_comb_ref.sum(axis=1, keepdims=True) + 1e-6)
    sl_ref = jax.nn.softmax(R_norm_ref @ lin_w.T + lin_b, axis=1)
    ep_ref = expr_q @ sl_ref
    ep_ref = jnp.log1p(ep_ref / (ep_ref.sum(axis=1, keepdims=True) + 1e-4) * 1e5)
    gp_ref = sl_ref.T @ emb_q

    checks = [
        ("R_comb", R_comb_k, R_comb_ref, 1e-2, 1e-3),   # bf16 writeback of R_comb
        ("s_l", sl_k, sl_ref, 5e-3, 1e-4),
        ("expr_pool", ep_k, ep_ref, 1e-2, 2e-2),
        ("gene_pool", gp_k, gp_ref, 1e-2, 1e-2),
    ]
    for name, got, want, rtol, atol in checks:
        assert got.shape == want.shape and got.dtype == want.dtype, name
        assert jnp.allclose(got, want, rtol=rtol, atol=atol), \
            f"kernel/reference mismatch: {name}"

    print("KERNEL_OK")
</pallas_src>

<mosaic_0001>
module attributes {stable_mosaic.version = 11 : i64} {
  func.func @_assign_kernel(%arg0: i32, %arg1: memref<1x4xf32, #tpu.memory_space<vmem>>, %arg2: memref<3x128x128xbf16, #tpu.memory_space<vmem>>, %arg3: memref<128x128xbf16, #tpu.memory_space<vmem>>, %arg4: memref<1x128xf32, #tpu.memory_space<vmem>>, %arg5: memref<128x128xbf16, #tpu.memory_space<vmem>>, %arg6: memref<128x128xf32, #tpu.memory_space<vmem>>) attributes {dimension_semantics = [#tpu.dimension_semantics<parallel>], iteration_bounds = array<i64: 1>, scalar_prefetch = 0 : i64, scratch_operands = 0 : i64, tpu.core_type = #tpu.core_type<tc>, window_params = [{pipeline_mode = #tpu.pipeline_mode<synchronous>, transform_indices = @transform_0, window_bounds = array<i64: 1, 4>}, {transform_indices = @transform_1, window_bounds = array<i64: 3, 128, 128>}, {pipeline_mode = #tpu.pipeline_mode<synchronous>, transform_indices = @transform_2, window_bounds = array<i64: 128, 128>}, {pipeline_mode = #tpu.pipeline_mode<synchronous>, transform_indices = @transform_3, window_bounds = array<i64: 1, 128>}, {transform_indices = @transform_4, window_bounds = array<i64: 128, 128>}, {transform_indices = @transform_5, window_bounds = array<i64: 128, 128>}]} {
    %c0 = arith.constant 0 : index
    %c0_0 = arith.constant 0 : index
    %0 = vector.load %arg1[%c0, %c0_0] : memref<1x4xf32, #tpu.memory_space<vmem>>, vector<1x4xf32>
    %1 = vector.extract_strided_slice %0 {offsets = [0, 1], sizes = [1, 1], strides = [1, 1]} : vector<1x4xf32> to vector<1x1xf32>
    %2 = vector.extract %1[0, 0] : f32 from vector<1x1xf32>
    %c0_1 = arith.constant 0 : index
    %c0_2 = arith.constant 0 : index
    %c0_3 = arith.constant 0 : index
    %3 = vector.load %arg2[%c0_1, %c0_2, %c0_3] : memref<3x128x128xbf16, #tpu.memory_space<vmem>>, vector<1x128x128xbf16>
    %4 = vector.shape_cast %3 : vector<1x128x128xbf16> to vector<128x128xbf16>
    %5 = arith.extf %4 : vector<128x128xbf16> to vector<128x128xf32>
    %6 = vector.broadcast %2 : f32 to vector<128x128xf32>
    %7 = arith.mulf %6, %5 : vector<128x128xf32>
    %8 = vector.extract_strided_slice %0 {offsets = [0, 2], sizes = [1, 1], strides = [1, 1]} : vector<1x4xf32> to vector<1x1xf32>
    %9 = vector.extract %8[0, 0] : f32 from vector<1x1xf32>
    %c1 = arith.constant 1 : index
    %c0_4 = arith.constant 0 : index
    %c0_5 = arith.constant 0 : index
    %10 = vector.load %arg2[%c1, %c0_4, %c0_5] : memref<3x128x128xbf16, #tpu.memory_space<vmem>>, vector<1x128x128xbf16>
    %11 = vector.shape_cast %10 : vector<1x128x128xbf16> to vector<128x128xbf16>
    %12 = arith.extf %11 : vector<128x128xbf16> to vector<128x128xf32>
    %13 = vector.broadcast %9 : f32 to vector<128x128xf32>
    %14 = arith.mulf %13, %12 : vector<128x128xf32>
    %15 = arith.addf %7, %14 : vector<128x128xf32>
    %16 = vector.extract_strided_slice %0 {offsets = [0, 3], sizes = [1, 1], strides = [1, 1]} : vector<1x4xf32> to vector<1x1xf32>
    %17 = vector.extract %16[0, 0] : f32 from vector<1x1xf32>
    %c2 = arith.constant 2 : index
    %c0_6 = arith.constant 0 : index
    %c0_7 = arith.constant 0 : index
    %18 = vector.load %arg2[%c2, %c0_6, %c0_7] : memref<3x128x128xbf16, #tpu.memory_space<vmem>>, vector<1x128x128xbf16>
    %19 = vector.shape_cast %18 : vector<1x128x128xbf16> to vector<128x128xbf16>
    %20 = arith.extf %19 : vector<128x128xbf16> to vector<128x128xf32>
    %21 = vector.broadcast %17 : f32 to vector<128x128xf32>
    %22 = arith.mulf %21, %20 : vector<128x128xf32>
    %23 = arith.addf %15, %22 : vector<128x128xf32>
    %24 = tpu.iota {dimensions = array<i32: 0>} : vector<128x128xi32>
    %c128_i32 = arith.constant 128 : i32
    %25 = arith.muli %arg0, %c128_i32 : i32
    %26 = vector.broadcast %25 : i32 to vector<128x128xi32>
    %27 = arith.addi %24, %26 : vector<128x128xi32>
    %28 = tpu.iota {dimensions = array<i32: 1>} : vector<128x128xi32>
    %29 = arith.cmpi eq, %27, %28 : vector<128x128xi32>
    %30 = vector.extract_strided_slice %0 {offsets = [0, 0], sizes = [1, 1], strides = [1, 1]} : vector<1x4xf32> to vector<1x1xf32>
    %31 = vector.extract %30[0, 0] : f32 from vector<1x1xf32>
    %cst = arith.constant 0.000000e+00 : f32
    %32 = vector.broadcast %31 : f32 to vector<128x128xf32>
    %33 = vector.broadcast %cst : f32 to vector<128x128xf32>
    %34 = arith.select %29, %32, %33 : vector<128x128xi1>, vector<128x128xf32>
    %35 = arith.addf %23, %34 : vector<128x128xf32>
    %36 = arith.truncf %35 : vector<128x128xf32> to vector<128x128xbf16>
    %c0_8 = arith.constant 0 : index
    %c0_9 = arith.constant 0 : index
    %37 = vector.load %arg5[%c0_8, %c0_9] : memref<128x128xbf16, #tpu.memory_space<vmem>>, vector<128x128xbf16>
    tpu.vector_store %arg5[%c0_8, %c0_9], %36 {strides = array<i32>} : memref<128x128xbf16, #tpu.memory_space<vmem>>, vector<128x128xbf16>,
    %cst_10 = arith.constant dense<0.000000e+00> : vector<128xf32>
    %38 = vector.multi_reduction <add>, %35, %cst_10 [1] : vector<128x128xf32> to vector<128xf32>
    %39 = vector.shape_cast %38 : vector<128xf32> to vector<128x1xf32>
    %cst_11 = arith.constant 9.99999997E-7 : f32
    %40 = vector.broadcast %cst_11 : f32 to vector<128x1xf32>
    %41 = arith.addf %39, %40 : vector<128x1xf32>
    %42 = tpu.reciprocal %41 {approx = true} : vector<128x1xf32> -> vector<128x1xf32>
    %43 = vector.broadcast %42 : vector<128x1xf32> to vector<128x128xf32>
    %44 = arith.mulf %35, %43 : vector<128x128xf32>
    %45 = arith.truncf %44 : vector<128x128xf32> to vector<128x128xbf16>
    %c0_12 = arith.constant 0 : index
    %c0_13 = arith.constant 0 : index
    %46 = vector.load %arg3[%c0_12, %c0_13] : memref<128x128xbf16, #tpu.memory_space<vmem>>, vector<128x128xbf16>
    %cst_14 = arith.constant dense<0.000000e+00> : vector<128x128xf32>
    %47 = tpu.matmul %45, %46, %cst_14 {dimension_numbers = #tpu.dot_dimension_numbers<[1], [0], [0], [1], [0, 0, 1, 1], [], []>} : vector<128x128xbf16>, vector<128x128xbf16>, vector<128x128xf32> -> vector<128x128xf32>
    %c0_15 = arith.constant 0 : index
    %c0_16 = arith.constant 0 : index
    %48 = vector.load %arg4[%c0_15, %c0_16] : memref<1x128xf32, #tpu.memory_space<vmem>>, vector<1x128xf32>
    %49 = vector.broadcast %48 : vector<1x128xf32> to vector<128x128xf32>
    %50 = arith.addf %47, %49 : vector<128x128xf32>
    %cst_17 = arith.constant dense<0xFF800000> : vector<128xf32>
    %51 = vector.multi_reduction <maximumf>, %50, %cst_17 [1] : vector<128x128xf32> to vector<128xf32>
    %52 = vector.shape_cast %51 : vector<128xf32> to vector<128x1xf32>
    %53 = vector.broadcast %52 : vector<128x1xf32> to vector<128x128xf32>
    %54 = arith.subf %50, %53 : vector<128x128xf32>
    %55 = math.exp %54 : vector<128x128xf32>
    %cst_18 = arith.constant dense<0.000000e+00> : vector<128xf32>
    %56 = vector.multi_reduction <add>, %55, %cst_18 [1] : vector<128x128xf32> to vector<128xf32>
    %57 = vector.shape_cast %56 : vector<128xf32> to vector<128x1xf32>
    %58 = tpu.reciprocal %57 {approx = true} : vector<128x1xf32> -> vector<128x1xf32>
    %59 = vector.broadcast %58 : vector<128x1xf32> to vector<128x128xf32>
    %60 = arith.mulf %55, %59 : vector<128x128xf32>
    %c0_19 = arith.constant 0 : index
    %c0_20 = arith.constant 0 : index
    %61 = vector.load %arg6[%c0_19, %c0_20] : memref<128x128xf32, #tpu.memory_space<vmem>>, vector<128x128xf32>
    tpu.vector_store %arg6[%c0_19, %c0_20], %60 {strides = array<i32>} : memref<128x128xf32, #tpu.memory_space<vmem>>, vector<128x128xf32>,
    return
  }
  func.func @transform_0(%arg0: i32) -> (i32, i32) {
    %c0_i32 = arith.constant 0 : i32
    %c0_i32_0 = arith.constant 0 : i32
    %c0_i32_1 = arith.constant 0 : i32
    return %c0_i32, %c0_i32_0 : i32, i32
  }
  func.func @transform_1(%arg0: i32) -> (i32, i32, i32) {
    %c0_i32 = arith.constant 0 : i32
    %c0_i32_0 = arith.constant 0 : i32
    %c0_i32_1 = arith.constant 0 : i32
    return %c0_i32, %arg0, %c0_i32_0 : i32, i32, i32
  }
  func.func @transform_2(%arg0: i32) -> (i32, i32) {
    %c0_i32 = arith.constant 0 : i32
    %c0_i32_0 = arith.constant 0 : i32
    %c0_i32_1 = arith.constant 0 : i32
    return %c0_i32, %c0_i32_0 : i32, i32
  }
  func.func @transform_3(%arg0: i32) -> (i32, i32) {
    %c0_i32 = arith.constant 0 : i32
    %c0_i32_0 = arith.constant 0 : i32
    %c0_i32_1 = arith.constant 0 : i32
    return %c0_i32, %c0_i32_0 : i32, i32
  }
  func.func @transform_4(%arg0: i32) -> (i32, i32) {
    %c0_i32 = arith.constant 0 : i32
    %c0_i32_0 = arith.constant 0 : i32
    return %arg0, %c0_i32 : i32, i32
  }
  func.func @transform_5(%arg0: i32) -> (i32, i32) {
    %c0_i32 = arith.constant 0 : i32
    %c0_i32_0 = arith.constant 0 : i32
    return %arg0, %c0_i32 : i32, i32
  }
}

</mosaic_0001>

<llo_original>
// kernel: tpu_custom_call.1
$region0: #{tpu_custom_call.1}
  #allocation0 [shape = 'u32[]', space=smem, size = 0x4, offset = 0x4, fixed_abs, tag = 'smem constant byte address 0x4 - core index']
  #allocation1 [shape = 'u32[144,128]{1,0:T(1,128)}', space=vmem, size = 0x12000, scoped, tag = 'internal scratch']
  %s0 = inlined_call_operand.hbm [shape: f32[1,4], index: 0, kind: input, shape index: {}]
  %s1 = inlined_call_operand.hbm [shape: bf16[3,128,128], index: 1, kind: input, shape index: {}]
  %s2 = inlined_call_operand.hbm [shape: bf16[128,128], index: 2, kind: input, shape index: {}]
  %s3 = inlined_call_operand.vmem [shape: f32[1,128], index: 3, kind: input, shape index: {}]
  %s4 = inlined_call_operand.hbm [shape: bf16[128,128], index: 4, kind: output, shape index: {0}]
  %s5 = inlined_call_operand.hbm [shape: f32[128,128], index: 5, kind: output, shape index: {1}]
  %6 = xla_tuple %s4, %s5
  %s7 = sld [smem:[#allocation0]]
  $region46: #{tpu_custom_call.1} parent=0
    _
  %s9 = ssub.s32 1, %s7
  %s10 = scalar_select 0, %s9, %s7
  $region1: #{tpu_custom_call.1} parent=0
    #allocation2 [shape = 'u8[512]{0}', space=vmem, size = 0x400, scoped, tag = 'input window, operand 0, single buffered']
    #allocation3 [shape = 's32[1]{0}', space=sflag, size = 0x4, scoped, tag = 'scoped memory for tpu_custom_call.1']
    #allocation4 [shape = 's32[1]{0}', space=sflag, size = 0x4, scoped, tag = 'scoped memory for tpu_custom_call.1']
    #allocation5 [shape = 'u8[98304]{0}', space=vmem, size = 0x18000, scoped, tag = 'input window, operand 1, single buffered']
    #allocation6 [shape = 's32[1]{0}', space=sflag, size = 0x4, scoped, tag = 'scoped memory for tpu_custom_call.1']
    #allocation7 [shape = 'u8[32768]{0}', space=vmem, size = 0x8000, scoped, tag = 'input window, operand 2, single buffered']
    #allocation8 [shape = 'u8[32768]{0}', space=vmem, size = 0x8000, scoped, tag = 'output window, operand 0, single buffered']
    #allocation9 [shape = 'u8[65536]{0}', space=vmem, size = 0x10000, scoped, tag = 'output window, operand 1, single buffered']
    #allocation10 [shape = 's32[1]{0}', space=sflag, size = 0x4, scoped, tag = 'scoped memory for tpu_custom_call.1']
    %11 = vsyncpa [#allocation3], 0
    %12 = vsyncpa [#allocation6], 0
    %13 = vsyncpa [#allocation4], 0
    %14 = vsyncpa [#allocation10], 0
    // Predicated region
    $region2: #{tpu_custom_call.1} parent=1 // pred_check
      _
    $region3: #{tpu_custom_call.1} parent=1 // pred_check_branch
      %16 = sbr.rel (0) target = $region5
    $region4: #{tpu_custom_call.1} parent=1 // pred_region
      %s18 = ssub.s32 16, 16
      %19 = vsyncadd [#allocation3], %s18
      %s21 = sshll.u32 [#allocation2], 4
      %s22 = int_to_ptr.vmem [resolvable:$true] %s21
      %24 = dma.hbm_to_vmem [thread:$0]  %s0, 16, %s22, [#allocation3]
    $region5: #{tpu_custom_call.1} parent=1 // pred_fallthru
      _
    // Predicated region
    $region6: #{tpu_custom_call.1} parent=1 // pred_check
      _
    $region7: #{tpu_custom_call.1} parent=1 // pred_check_branch
      %26 = sbr.rel (0) target = $region9
    $region8: #{tpu_custom_call.1} parent=1 // pred_region
      %s28 = ssub.s32 3072, 3072
      %29 = vsyncadd [#allocation6], %s28
      %s30 = sshll.u32 [#allocation5], 4
      %s31 = int_to_ptr.vmem [resolvable:$true] %s30
      %36 = dma.hbm_to_vmem [thread:$0]  %s1, 3072, %s31, [#allocation6], 64, 64, 4
    $region9: #{tpu_custom_call.1} parent=1 // pred_fallthru
      _
    // Predicated region
    $region10: #{tpu_custom_call.1} parent=1 // pred_check
      _
    $region11: #{tpu_custom_call.1} parent=1 // pred_check_branch
      %38 = sbr.rel (0) target = $region13
    $region12: #{tpu_custom_call.1} parent=1 // pred_region
      %s40 = ssub.s32 1024, 1024
      %41 = vsyncadd [#allocation6], %s40
      %s42 = sshll.u32 [#allocation7], 4
      %s43 = int_to_ptr.vmem [resolvable:$true] %s42
      %48 = dma.hbm_to_vmem [thread:$0]  %s2, 1024, %s43, [#allocation6], 64, 64, 4
    $region13: #{tpu_custom_call.1} parent=1 // pred_fallthru
      _
    // Predicated region
    $region14: #{tpu_custom_call.1} parent=1 // pred_check
      _
    $region15: #{tpu_custom_call.1} parent=1 // pred_check_branch
      %50 = sbr.rel (0) target = $region17
    $region16: #{tpu_custom_call.1} parent=1 // pred_region
      _
    $region17: #{tpu_custom_call.1} parent=1 // pred_fallthru
      _
    // Predicated region
    $region18: #{tpu_custom_call.1} parent=1 // pred_check
      _
    $region19: #{tpu_custom_call.1} parent=1 // pred_check_branch
      %52 = sbr.rel (0) target = $region21
    $region20: #{tpu_custom_call.1} parent=1 // pred_region
      %53 = dma.done [#allocation3], 16
    $region21: #{tpu_custom_call.1} parent=1 // pred_fallthru
      _
    // Predicated region
    $region22: #{tpu_custom_call.1} parent=1 // pred_check
      _
    $region23: #{tpu_custom_call.1} parent=1 // pred_check_branch
      %55 = sbr.rel (0) target = $region25
    $region24: #{tpu_custom_call.1} parent=1 // pred_region
      %56 = dma.done [#allocation6], 3072
    $region25: #{tpu_custom_call.1} parent=1 // pred_fallthru
      _
    // Predicated region
    $region26: #{tpu_custom_call.1} parent=1 // pred_check
      _
    $region27: #{tpu_custom_call.1} parent=1 // pred_check_branch
      %58 = sbr.rel (0) target = $region29
    $region28: #{tpu_custom_call.1} parent=1 // pred_region
      %59 = dma.done [#allocation6], 1024
    $region29: #{tpu_custom_call.1} parent=1 // pred_fallthru
      _
    %v61 = vld [vmem:[#allocation2] sm:$0x1]
    %62 = vrot.lane.b32.xlu0 %v61, 127
    %v63 = vpop.permute.xlu0 %62
    %s64 = vtos %v63
    %v65 = vld [vmem:[#allocation5] sm:$0xf]
    %v66 = vld [vmem:[#allocation5 + $0x4] sm:$0xf]
    %v67 = vld [vmem:[#allocation5 + $0x8] sm:$0xf]
    %v68 = vld [vmem:[#allocation5 + $0xc] sm:$0xf]
    %v69 = vld [vmem:[#allocation5 + $0x10] sm:$0xf]
    %v70 = vld [vmem:[#allocation5 + $0x14] sm:$0xf]
    %v71 = vld [vmem:[#allocation5 + $0x18] sm:$0xf]
    %v72 = vld [vmem:[#allocation5 + $0x1c] sm:$0xf]
    %v73 = vld [vmem:[#allocation5 + $0x20] sm:$0xf]
    %v74 = vld [vmem:[#allocation5 + $0x24] sm:$0xf]
    %v75 = vld [vmem:[#allocation5 + $0x28] sm:$0xf]
    %v76 = vld [vmem:[#allocation5 + $0x2c] sm:$0xf]
    %v77 = vld [vmem:[#allocation5 + $0x30] sm:$0xf]
    %v78 = vld [vmem:[#allocation5 + $0x34] sm:$0xf]
    %v79 = vld [vmem:[#allocation5 + $0x38] sm:$0xf]
    %v80 = vld [vmem:[#allocation5 + $0x3c] sm:$0xf]
    %v81 = vunpack.c.l.bf16 %v65
    %v82 = vunpack.c.l.bf16 %v66
    %v83 = vunpack.c.l.bf16 %v67
    %v84 = vunpack.c.l.bf16 %v68
    %v85 = vunpack.c.l.bf16 %v69
    %v86 = vunpack.c.l.bf16 %v70
    %v87 = vunpack.c.l.bf16 %v71
    %v88 = vunpack.c.l.bf16 %v72
    %v89 = vunpack.c.l.bf16 %v73
    %v90 = vunpack.c.l.bf16 %v74
    %v91 = vunpack.c.l.bf16 %v75
    %v92 = vunpack.c.l.bf16 %v76
    %v93 = vunpack.c.l.bf16 %v77
    %v94 = vunpack.c.l.bf16 %v78
    %v95 = vunpack.c.l.bf16 %v79
    %v96 = vunpack.c.l.bf16 %v80
    %v97 = vstv %s64
    %v98 = vmul.f32 %v97, %v81
    %v99 = vmul.f32 %v97, %v82
    %v100 = vmul.f32 %v97, %v83
    %v101 = vmul.f32 %v97, %v84
    %v102 = vmul.f32 %v97, %v85
    %v103 = vmul.f32 %v97, %v86
    %v104 = vmul.f32 %v97, %v87
    %v105 = vmul.f32 %v97, %v88
    %v106 = vmul.f32 %v97, %v89
    %v107 = vmul.f32 %v97, %v90
    %v108 = vmul.f32 %v97, %v91
    %v109 = vmul.f32 %v97, %v92
    %v110 = vmul.f32 %v97, %v93
    %v111 = vmul.f32 %v97, %v94
    %v112 = vmul.f32 %v97, %v95
    %v113 = vmul.f32 %v97, %v96
    %114 = vrot.lane.b32.xlu0 %v61, 126
    %v115 = vpop.permute.xlu0 %114
    %s116 = vtos %v115
    %s117 = scalar_lea.vmem [#allocation5], 64
    %v118 = vld [vmem:[%s117] sm:$0xf]
    %v119 = vld [vmem:[%s117 + $0x4] sm:$0xf]
    %v120 = vld [vmem:[%s117 + $0x8] sm:$0xf]
    %v121 = vld [vmem:[%s117 + $0xc] sm:$0xf]
    %v122 = vld [vmem:[%s117 + $0x10] sm:$0xf]
    %v123 = vld [vmem:[%s117 + $0x14] sm:$0xf]
    %v124 = vld [vmem:[%s117 + $0x18] sm:$0xf]
    %v125 = vld [vmem:[%s117 + $0x1c] sm:$0xf]
    %v126 = vld [vmem:[%s117 + $0x20] sm:$0xf]
    %v127 = vld [vmem:[%s117 + $0x24] sm:$0xf]
    %v128 = vld [vmem:[%s117 + $0x28] sm:$0xf]
    %v129 = vld [vmem:[%s117 + $0x2c] sm:$0xf]
    %v130 = vld [vmem:[%s117 + $0x30] sm:$0xf]
    %v131 = vld [vmem:[%s117 + $0x34] sm:$0xf]
    %v132 = vld [vmem:[%s117 + $0x38] sm:$0xf]
    %v133 = vld [vmem:[%s117 + $0x3c] sm:$0xf]
    %v134 = vunpack.c.l.bf16 %v118
    %v135 = vunpack.c.l.bf16 %v119
    %v136 = vunpack.c.l.bf16 %v120
    %v137 = vunpack.c.l.bf16 %v121
    %v138 = vunpack.c.l.bf16 %v122
    %v139 = vunpack.c.l.bf16 %v123
    %v140 = vunpack.c.l.bf16 %v124
    %v141 = vunpack.c.l.bf16 %v125
    %v142 = vunpack.c.l.bf16 %v126
    %v143 = vunpack.c.l.bf16 %v127
    %v144 = vunpack.c.l.bf16 %v128
    %v145 = vunpack.c.l.bf16 %v129
    %v146 = vunpack.c.l.bf16 %v130
    %v147 = vunpack.c.l.bf16 %v131
    %v148 = vunpack.c.l.bf16 %v132
    %v149 = vunpack.c.l.bf16 %v133
    %v150 = vstv %s116
    %v151 = vmul.f32 %v150, %v134
    %v152 = vmul.f32 %v150, %v135
    %v153 = vmul.f32 %v150, %v136
    %v154 = vmul.f32 %v150, %v137
    %v155 = vmul.f32 %v150, %v138
    %v156 = vmul.f32 %v150, %v139
    %v157 = vmul.f32 %v150, %v140
    %v158 = vmul.f32 %v150, %v141
    %v159 = vmul.f32 %v150, %v142
    %v160 = vmul.f32 %v150, %v143
    %v161 = vmul.f32 %v150, %v144
    %v162 = vmul.f32 %v150, %v145
    %v163 = vmul.f32 %v150, %v146
    %v164 = vmul.f32 %v150, %v147
    %v165 = vmul.f32 %v150, %v148
    %v166 = vmul.f32 %v150, %v149
    %v167 = vadd.f32 %v98, %v151
    %v168 = vadd.f32 %v99, %v152
    %v169 = vadd.f32 %v100, %v153
    %v170 = vadd.f32 %v101, %v154
    %v171 = vadd.f32 %v102, %v155
    %v172 = vadd.f32 %v103, %v156
    %v173 = vadd.f32 %v104, %v157
    %v174 = vadd.f32 %v105, %v158
    %v175 = vadd.f32 %v106, %v159
    %v176 = vadd.f32 %v107, %v160
    %v177 = vadd.f32 %v108, %v161
    %v178 = vadd.f32 %v109, %v162
    %v179 = vadd.f32 %v110, %v163
    %v180 = vadd.f32 %v111, %v164
    %v181 = vadd.f32 %v112, %v165
    %v182 = vadd.f32 %v113, %v166
    %183 = vrot.lane.b32.xlu0 %v61, 125
    %v184 = vpop.permute.xlu0 %183
    %s185 = vtos %v184
    %s186 = scalar_lea.vmem [#allocation5], 128
    %v187 = vld [vmem:[%s186] sm:$0xf]
    %v188 = vld [vmem:[%s186 + $0x4] sm:$0xf]
    %v189 = vld [vmem:[%s186 + $0x8] sm:$0xf]
    %v190 = vld [vmem:[%s186 + $0xc] sm:$0xf]
    %v191 = vld [vmem:[%s186 + $0x10] sm:$0xf]
    %v192 = vld [vmem:[%s186 + $0x14] sm:$0xf]
    %v193 = vld [vmem:[%s186 + $0x18] sm:$0xf]
    %v194 = vld [vmem:[%s186 + $0x1c] sm:$0xf]
    %v195 = vld [vmem:[%s186 + $0x20] sm:$0xf]
    %v196 = vld [vmem:[%s186 + $0x24] sm:$0xf]
    %v197 = vld [vmem:[%s186 + $0x28] sm:$0xf]
    %v198 = vld [vmem:[%s186 + $0x2c] sm:$0xf]
    %v199 = vld [vmem:[%s186 + $0x30] sm:$0xf]
    %v200 = vld [vmem:[%s186 + $0x34] sm:$0xf]
    %v201 = vld [vmem:[%s186 + $0x38] sm:$0xf]
    %v202 = vld [vmem:[%s186 + $0x3c] sm:$0xf]
    %v203 = vunpack.c.l.bf16 %v187
    %v204 = vunpack.c.l.bf16 %v188
    %v205 = vunpack.c.l.bf16 %v189
    %v206 = vunpack.c.l.bf16 %v190
    %v207 = vunpack.c.l.bf16 %v191
    %v208 = vunpack.c.l.bf16 %v192
    %v209 = vunpack.c.l.bf16 %v193
    %v210 = vunpack.c.l.bf16 %v194
    %v211 = vunpack.c.l.bf16 %v195
    %v212 = vunpack.c.l.bf16 %v196
    %v213 = vunpack.c.l.bf16 %v197
    %v214 = vunpack.c.l.bf16 %v198
    %v215 = vunpack.c.l.bf16 %v199
    %v216 = vunpack.c.l.bf16 %v200
    %v217 = vunpack.c.l.bf16 %v201
    %v218 = vunpack.c.l.bf16 %v202
    %v219 = vstv %s185
    %v220 = vmul.f32 %v219, %v203
    %v221 = vmul.f32 %v219, %v204
    %v222 = vmul.f32 %v219, %v205
    %v223 = vmul.f32 %v219, %v206
    %v224 = vmul.f32 %v219, %v207
    %v225 = vmul.f32 %v219, %v208
    %v226 = vmul.f32 %v219, %v209
    %v227 = vmul.f32 %v219, %v210
    %v228 = vmul.f32 %v219, %v211
    %v229 = vmul.f32 %v219, %v212
    %v230 = vmul.f32 %v219, %v213
    %v231 = vmul.f32 %v219, %v214
    %v232 = vmul.f32 %v219, %v215
    %v233 = vmul.f32 %v219, %v216
    %v234 = vmul.f32 %v219, %v217
    %v235 = vmul.f32 %v219, %v218
    %v236 = vadd.f32 %v167, %v220
    %v237 = vadd.f32 %v168, %v221
    %v238 = vadd.f32 %v169, %v222
    %v239 = vadd.f32 %v170, %v223
    %v240 = vadd.f32 %v171, %v224
    %v241 = vadd.f32 %v172, %v225
    %v242 = vadd.f32 %v173, %v226
    %v243 = vadd.f32 %v174, %v227
    %v244 = vadd.f32 %v175, %v228
    %v245 = vadd.f32 %v176, %v229
    %v246 = vadd.f32 %v177, %v230
    %v247 = vadd.f32 %v178, %v231
    %v248 = vadd.f32 %v179, %v232
    %v249 = vadd.f32 %v180, %v233
    %v250 = vadd.f32 %v181, %v234
    %v251 = vadd.f32 %v182, %v235
    %v252 = vlaneseq
    %v253 = vshrl.u32 %v252, 7
    %v254 = vadd.s32 %v253, 8
    %v255 = vadd.s32 %v253, 16
    %v256 = vadd.s32 %v253, 24
    %v257 = vadd.s32 %v253, 32
    %v258 = vadd.s32 %v253, 40
    %v259 = vadd.s32 %v253, 48
    %v260 = vadd.s32 %v253, 56
    %v261 = vadd.s32 %v253, 64
    %v262 = vadd.s32 %v253, 72
    %v263 = vadd.s32 %v253, 80
    %v264 = vadd.s32 %v253, 88
    %v265 = vadd.s32 %v253, 96
    %v266 = vadd.s32 %v253, 104
    %v267 = vadd.s32 %v253, 112
    %v268 = vadd.s32 %v253, 120
    %s269 = smul.u32 0, 128
    %v270 = vstv %s269
    %v271 = vadd.s32 %v253, %v270
    %v272 = vadd.s32 %v254, %v270
    %v273 = vadd.s32 %v255, %v270
    %v274 = vadd.s32 %v256, %v270
    %v275 = vadd.s32 %v257, %v270
    %v276 = vadd.s32 %v258, %v270
    %v277 = vadd.s32 %v259, %v270
    %v278 = vadd.s32 %v260, %v270
    %v279 = vadd.s32 %v261, %v270
    %v280 = vadd.s32 %v262, %v270
    %v281 = vadd.s32 %v263, %v270
    %v282 = vadd.s32 %v264, %v270
    %v283 = vadd.s32 %v265, %v270
    %v284 = vadd.s32 %v266, %v270
    %v285 = vadd.s32 %v267, %v270
    %v286 = vadd.s32 %v268, %v270
    %v287 = vlaneseq
    %v288 = vand.u32 %v287, 127
    %vm289 = vcmp.eq.s32.totalorder %v271, %v288
    %vm290 = vcmp.eq.s32.totalorder %v272, %v288
    %vm291 = vcmp.eq.s32.totalorder %v273, %v288
    %vm292 = vcmp.eq.s32.totalorder %v274, %v288
    %vm293 = vcmp.eq.s32.totalorder %v275, %v288
    %vm294 = vcmp.eq.s32.totalorder %v276, %v288
    %vm295 = vcmp.eq.s32.totalorder %v277, %v288
    %vm296 = vcmp.eq.s32.totalorder %v278, %v288
    %vm297 = vcmp.eq.s32.totalorder %v279, %v288
    %vm298 = vcmp.eq.s32.totalorder %v280, %v288
    %vm299 = vcmp.eq.s32.totalorder %v281, %v288
    %vm300 = vcmp.eq.s32.totalorder %v282, %v288
    %vm301 = vcmp.eq.s32.totalorder %v283, %v288
    %vm302 = vcmp.eq.s32.totalorder %v284, %v288
    %vm303 = vcmp.eq.s32.totalorder %v285, %v288
    %vm304 = vcmp.eq.s32.totalorder %v286, %v288
    %s305 = vtos %v61
    %v306 = vstv %s305
    %v307 = vsel %vm289, %v306, 0.0
    %v308 = vsel %vm290, %v306, 0.0
    %v309 = vsel %vm291, %v306, 0.0
    %v310 = vsel %vm292, %v306, 0.0
    %v311 = vsel %vm293, %v306, 0.0
    %v312 = vsel %vm294, %v306, 0.0
    %v313 = vsel %vm295, %v306, 0.0
    %v314 = vsel %vm296, %v306, 0.0
    %v315 = vsel %vm297, %v306, 0.0
    %v316 = vsel %vm298, %v306, 0.0
    %v317 = vsel %vm299, %v306, 0.0
    %v318 = vsel %vm300, %v306, 0.0
    %v319 = vsel %vm301, %v306, 0.0
    %v320 = vsel %vm302, %v306, 0.0
    %v321 = vsel %vm303, %v306, 0.0
    %v322 = vsel %vm304, %v306, 0.0
    %v323 = vadd.f32 %v236, %v307
    %v324 = vadd.f32 %v237, %v308
    %v325 = vadd.f32 %v238, %v309
    %v326 = vadd.f32 %v239, %v310
    %v327 = vadd.f32 %v240, %v311
    %v328 = vadd.f32 %v241, %v312
    %v329 = vadd.f32 %v242, %v313
    %v330 = vadd.f32 %v243, %v314
    %v331 = vadd.f32 %v244, %v315
    %v332 = vadd.f32 %v245, %v316
    %v333 = vadd.f32 %v246, %v317
    %v334 = vadd.f32 %v247, %v318
    %v335 = vadd.f32 %v248, %v319
    %v336 = vadd.f32 %v249, %v320
    %v337 = vadd.f32 %v250, %v321
    %v338 = vadd.f32 %v251, %v322
    %v339 = vpack.c.bf16 %v324, %v323
    %v340 = vpack.c.bf16 %v326, %v325
    %v341 = vpack.c.bf16 %v328, %v327
    %v342 = vpack.c.bf16 %v330, %v329
    %v343 = vpack.c.bf16 %v332, %v331
    %v344 = vpack.c.bf16 %v334, %v333
    %v345 = vpack.c.bf16 %v336, %v335
    %v346 = vpack.c.bf16 %v338, %v337
    %v355 = vunpack.c.l.b16 %v339
    %v356 = vunpack.c.h.b16 %v339
    %v357 = vunpack.c.l.b16 %v340
    %v358 = vunpack.c.h.b16 %v340
    %v359 = vunpack.c.l.b16 %v341
    %v360 = vunpack.c.h.b16 %v341
    %v361 = vunpack.c.l.b16 %v342
    %v362 = vunpack.c.h.b16 %v342
    %v363 = vunpack.c.l.b16 %v343
    %v364 = vunpack.c.h.b16 %v343
    %v365 = vunpack.c.l.b16 %v344
    %v366 = vunpack.c.h.b16 %v344
    %v367 = vunpack.c.l.b16 %v345
    %v368 = vunpack.c.h.b16 %v345
    %v369 = vunpack.c.l.b16 %v346
    %v370 = vunpack.c.h.b16 %v346
    %v371 = vpack.c.b16 %v355, %v355
    %v372 = vpack.c.b16 %v356, %v356
    %v373 = vpack.c.b16 %v357, %v357
    %v374 = vpack.c.b16 %v358, %v358
    %v375 = vpack.c.b16 %v359, %v359
    %v376 = vpack.c.b16 %v360, %v360
    %v377 = vpack.c.b16 %v361, %v361
    %v378 = vpack.c.b16 %v362, %v362
    %v379 = vpack.c.b16 %v363, %v363
    %v380 = vpack.c.b16 %v364, %v364
    %v381 = vpack.c.b16 %v365, %v365
    %v382 = vpack.c.b16 %v366, %v366
    %v383 = vpack.c.b16 %v367, %v367
    %v384 = vpack.c.b16 %v368, %v368
    %v385 = vpack.c.b16 %v369, %v369
    %v386 = vpack.c.b16 %v370, %v370
    %403 = vst [vmem:[#allocation8] sm:$0xf] %v371
    %404 = vst [vmem:[#allocation8 + $0x4] sm:$0xf] %v372
    %405 = vst [vmem:[#allocation8 + $0x8] sm:$0xf] %v373
    %406 = vst [vmem:[#allocation8 + $0xc] sm:$0xf] %v374
    %407 = vst [vmem:[#allocation8 + $0x10] sm:$0xf] %v375
    %408 = vst [vmem:[#allocation8 + $0x14] sm:$0xf] %v376
    %409 = vst [vmem:[#allocation8 + $0x18] sm:$0xf] %v377
    %410 = vst [vmem:[#allocation8 + $0x1c] sm:$0xf] %v378
    %411 = vst [vmem:[#allocation8 + $0x20] sm:$0xf] %v379
    %412 = vst [vmem:[#allocation8 + $0x24] sm:$0xf] %v380
    %413 = vst [vmem:[#allocation8 + $0x28] sm:$0xf] %v381
    %414 = vst [vmem:[#allocation8 + $0x2c] sm:$0xf] %v382
    %415 = vst [vmem:[#allocation8 + $0x30] sm:$0xf] %v383
    %416 = vst [vmem:[#allocation8 + $0x34] sm:$0xf] %v384
    %417 = vst [vmem:[#allocation8 + $0x38] sm:$0xf] %v385
    %418 = vst [vmem:[#allocation8 + $0x3c] sm:$0xf] %v386
    %419 = vadd.xlane.f32.xlu0 %v323
    %v420 = vpop.xlane.xlu0 %419
    %421 = vadd.xlane.f32.xlu0 %v324
    %v422 = vpop.xlane.xlu0 %421
    %423 = vadd.xlane.f32.xlu0 %v325
    %v424 = vpop.xlane.xlu0 %423
    %425 = vadd.xlane.f32.xlu0 %v326
    %v426 = vpop.xlane.xlu0 %425
    %427 = vadd.xlane.f32.xlu0 %v327
    %v428 = vpop.xlane.xlu0 %427
    %429 = vadd.xlane.f32.xlu0 %v328
    %v430 = vpop.xlane.xlu0 %429
    %431 = vadd.xlane.f32.xlu0 %v329
    %v432 = vpop.xlane.xlu0 %431
    %433 = vadd.xlane.f32.xlu0 %v330
    %v434 = vpop.xlane.xlu0 %433
    %435 = vadd.xlane.f32.xlu0 %v331
    %v436 = vpop.xlane.xlu0 %435
    %437 = vadd.xlane.f32.xlu0 %v332
    %v438 = vpop.xlane.xlu0 %437
    %439 = vadd.xlane.f32.xlu0 %v333
    %v440 = vpop.xlane.xlu0 %439
    %441 = vadd.xlane.f32.xlu0 %v334
    %v442 = vpop.xlane.xlu0 %441
    %443 = vadd.xlane.f32.xlu0 %v335
    %v444 = vpop.xlane.xlu0 %443
    %445 = vadd.xlane.f32.xlu0 %v336
    %v446 = vpop.xlane.xlu0 %445
    %447 = vadd.xlane.f32.xlu0 %v337
    %v448 = vpop.xlane.xlu0 %447
    %449 = vadd.xlane.f32.xlu0 %v338
    %v450 = vpop.xlane.xlu0 %449
    %v451 = vadd.f32 %v420, 1e-06
    %v452 = vadd.f32 %v422, 1e-06
    %v453 = vadd.f32 %v424, 1e-06
    %v454 = vadd.f32 %v426, 1e-06
    %v455 = vadd.f32 %v428, 1e-06
    %v456 = vadd.f32 %v430, 1e-06
    %v457 = vadd.f32 %v432, 1e-06
    %v458 = vadd.f32 %v434, 1e-06
    %v459 = vadd.f32 %v436, 1e-06
    %v460 = vadd.f32 %v438, 1e-06
    %v461 = vadd.f32 %v440, 1e-06
    %v462 = vadd.f32 %v442, 1e-06
    %v463 = vadd.f32 %v444, 1e-06
    %v464 = vadd.f32 %v446, 1e-06
    %v465 = vadd.f32 %v448, 1e-06
    %v466 = vadd.f32 %v450, 1e-06
    %v467 = vrcp.pop %v451
    %v468 = vrcp.pop %v452
    %v469 = vrcp.pop %v453
    %v470 = vrcp.pop %v454
    %v471 = vrcp.pop %v455
    %v472 = vrcp.pop %v456
    %v473 = vrcp.pop %v457
    %v474 = vrcp.pop %v458
    %v475 = vrcp.pop %v459
    %v476 = vrcp.pop %v460
    %v477 = vrcp.pop %v461
    %v478 = vrcp.pop %v462
    %v479 = vrcp.pop %v463
    %v480 = vrcp.pop %v464
    %v481 = vrcp.pop %v465
    %v482 = vrcp.pop %v466
    %v483 = vmul.f32 %v323, %v467
    %v484 = vmul.f32 %v324, %v468
    %v485 = vmul.f32 %v325, %v469
    %v486 = vmul.f32 %v326, %v470
    %v487 = vmul.f32 %v327, %v471
    %v488 = vmul.f32 %v328, %v472
    %v489 = vmul.f32 %v329, %v473
    %v490 = vmul.f32 %v330, %v474
    %v491 = vmul.f32 %v331, %v475
    %v492 = vmul.f32 %v332, %v476
    %v493 = vmul.f32 %v333, %v477
    %v494 = vmul.f32 %v334, %v478
    %v495 = vmul.f32 %v335, %v479
    %v496 = vmul.f32 %v336, %v480
    %v497 = vmul.f32 %v337, %v481
    %v498 = vmul.f32 %v338, %v482
    %v499 = vpack.c.bf16 %v484, %v483
    %v500 = vpack.c.bf16 %v486, %v485
    %v501 = vpack.c.bf16 %v488, %v487
    %v502 = vpack.c.bf16 %v490, %v489
    %v503 = vpack.c.bf16 %v492, %v491
    %v504 = vpack.c.bf16 %v494, %v493
    %v505 = vpack.c.bf16 %v496, %v495
    %v506 = vpack.c.bf16 %v498, %v497
    %v507 = vld [vmem:[#allocation7] sm:$0xf]
    %v508 = vld [vmem:[#allocation7 + $0x4] sm:$0xf]
    %v509 = vld [vmem:[#allocation7 + $0x8] sm:$0xf]
    %v510 = vld [vmem:[#allocation7 + $0xc] sm:$0xf]
    %v511 = vld [vmem:[#allocation7 + $0x10] sm:$0xf]
    %v512 = vld [vmem:[#allocation7 + $0x14] sm:$0xf]
    %v513 = vld [vmem:[#allocation7 + $0x18] sm:$0xf]
    %v514 = vld [vmem:[#allocation7 + $0x1c] sm:$0xf]
    %v515 = vld [vmem:[#allocation7 + $0x20] sm:$0xf]
    %v516 = vld [vmem:[#allocation7 + $0x24] sm:$0xf]
    %v517 = vld [vmem:[#allocation7 + $0x28] sm:$0xf]
    %v518 = vld [vmem:[#allocation7 + $0x2c] sm:$0xf]
    %v519 = vld [vmem:[#allocation7 + $0x30] sm:$0xf]
    %v520 = vld [vmem:[#allocation7 + $0x34] sm:$0xf]
    %v521 = vld [vmem:[#allocation7 + $0x38] sm:$0xf]
    %v522 = vld [vmem:[#allocation7 + $0x3c] sm:$0xf]
    %v523 = vld [vmem:[%s3] sm:$0x1]
    %v525 = vlaneseq
    %v526 = vshrl.u32 %v525, 7
    %v527 = vsub.s32 0, %v526
    %v528 = vrot.slane %v523, %v527
    %v546 = vunpack.c.l.b16 %v507
    %v547 = vunpack.c.l.b16 %v508
    %v548 = vunpack.c.l.b16 %v509
    %v549 = vunpack.c.l.b16 %v510
    %v550 = vunpack.c.l.b16 %v511
    %v551 = vunpack.c.l.b16 %v512
    %v552 = vunpack.c.l.b16 %v513
    %v553 = vunpack.c.l.b16 %v514
    %v554 = vunpack.c.l.b16 %v515
    %v555 = vunpack.c.l.b16 %v516
    %v556 = vunpack.c.l.b16 %v517
    %v557 = vunpack.c.l.b16 %v518
    %v558 = vunpack.c.l.b16 %v519
    %v559 = vunpack.c.l.b16 %v520
    %v560 = vunpack.c.l.b16 %v521
    %v561 = vunpack.c.l.b16 %v522
    %v562 = vpack.c.b16 %v547, %v546
    %v563 = vpack.c.b16 %v549, %v548
    %v564 = vpack.c.b16 %v551, %v550
    %v565 = vpack.c.b16 %v553, %v552
    %v566 = vpack.c.b16 %v555, %v554
    %v567 = vpack.c.b16 %v557, %v556
    %v568 = vpack.c.b16 %v559, %v558
    %v569 = vpack.c.b16 %v561, %v560
    %578 = vmatprep.subr.bf16.mxu0 0
    %579 = vmatpush1.bf16.msra.mxu0 %v562
    %580 = vmatprep.subr.bf16.mxu0 0
    %581 = vmatpush1.bf16.msra.mxu0 %v563
    %582 = vmatprep.subr.bf16.mxu0 0
    %583 = vmatpush1.bf16.msra.mxu0 %v564
    %584 = vmatprep.subr.bf16.mxu0 0
    %585 = vmatpush1.bf16.msra.mxu0 %v565
    %586 = vmatprep.subr.bf16.mxu0 0
    %587 = vmatpush1.bf16.msra.mxu0 %v566
    %588 = vmatprep.subr.bf16.mxu0 0
    %589 = vmatpush1.bf16.msra.mxu0 %v567
    %590 = vmatprep.subr.bf16.mxu0 0
    %591 = vmatpush1.bf16.msra.mxu0 %v568
    %592 = vmatprep.subr.bf16.mxu0 0
    %593 = vmatpush1.bf16.msra.mxu0 %v569
    %594 = vmatprep.subr.bf16.mxu0 0
    %595 = vmatpush1.bf16.msra.mxu0 0
    %596 = vmatprep.subr.bf16.mxu0 0
    %597 = vmatpush1.bf16.msra.mxu0 0
    %598 = vmatprep.subr.bf16.mxu0 0
    %599 = vmatpush1.bf16.msra.mxu0 0
    %600 = vmatprep.subr.bf16.mxu0 0
    %601 = vmatpush1.bf16.msra.mxu0 0
    %602 = vmatprep.subr.bf16.mxu0 0
    %603 = vmatpush1.bf16.msra.mxu0 0
    %604 = vmatprep.subr.bf16.mxu0 0
    %605 = vmatpush1.bf16.msra.mxu0 0
    %606 = vmatprep.subr.bf16.mxu0 0
    %607 = vmatpush1.bf16.msra.mxu0 0
    %608 = vmatprep.subr.bf16.mxu0 0
    %609 = vmatpush1.bf16.msra.mxu0 0
    %610 = vmatprep.mubr.bf16.mxu0 0
    %611 = vmatmul.mubr.bf16.gmra.mrb[0].mxu0 %v499
    %v612 = vpop.f32.mrb[0].mxu0
    %v613 = vadd.f32 %v528, %v612
    %v614 = vpop.f32.mrb[0].mxu0
    %v615 = vpop.f32.mrb[0].mxu0
    %v616 = vadd.f32 %v528, %v615
    %v617 = vpop.f32.mrb[0].mxu0
    %618 = vmatprep.mubr.bf16.mxu0 0
    %619 = vmatmul.mubr.bf16.gmra.mrb[0].mxu0 %v500
    %v620 = vpop.f32.mrb[0].mxu0
    %v621 = vadd.f32 %v528, %v620
    %v622 = vpop.f32.mrb[0].mxu0
    %v623 = vpop.f32.mrb[0].mxu0
    %v624 = vadd.f32 %v528, %v623
    %v625 = vpop.f32.mrb[0].mxu0
    %626 = vmatprep.mubr.bf16.mxu0 0
    %627 = vmatmul.mubr.bf16.gmra.mrb[0].mxu0 %v501
    %v628 = vpop.f32.mrb[0].mxu0
    %v629 = vadd.f32 %v528, %v628
    %v630 = vpop.f32.mrb[0].mxu0
    %v631 = vpop.f32.mrb[0].mxu0
    %v632 = vadd.f32 %v528, %v631
    %v633 = vpop.f32.mrb[0].mxu0
    %634 = vmatprep.mubr.bf16.mxu0 0
    %635 = vmatmul.mubr.bf16.gmra.mrb[0].mxu0 %v502
    %v636 = vpop.f32.mrb[0].mxu0
    %v637 = vadd.f32 %v528, %v636
    %v638 = vpop.f32.mrb[0].mxu0
    %v639 = vpop.f32.mrb[0].mxu0
    %v640 = vadd.f32 %v528, %v639
    %v641 = vpop.f32.mrb[0].mxu0
    %642 = vmatprep.mubr.bf16.mxu0 0
    %643 = vmatmul.mubr.bf16.gmra.mrb[0].mxu0 %v503
    %v644 = vpop.f32.mrb[0].mxu0
    %v645 = vadd.f32 %v528, %v644
    %v646 = vpop.f32.mrb[0].mxu0
    %v647 = vpop.f32.mrb[0].mxu0
    %v648 = vadd.f32 %v528, %v647
    %v649 = vpop.f32.mrb[0].mxu0
    %650 = vmatprep.mubr.bf16.mxu0 0
    %651 = vmatmul.mubr.bf16.gmra.mrb[0].mxu0 %v504
    %v652 = vpop.f32.mrb[0].mxu0
    %v653 = vadd.f32 %v528, %v652
    %v654 = vpop.f32.mrb[0].mxu0
    %v655 = vpop.f32.mrb[0].mxu0
    %v656 = vadd.f32 %v528, %v655
    %v657 = vpop.f32.mrb[0].mxu0
    %658 = vmatprep.mubr.bf16.mxu0 0
    %659 = vmatmul.mubr.bf16.gmra.mrb[0].mxu0 %v505
    %v660 = vpop.f32.mrb[0].mxu0
    %v661 = vadd.f32 %v528, %v660
    %v662 = vpop.f32.mrb[0].mxu0
    %v663 = vpop.f32.mrb[0].mxu0
    %v664 = vadd.f32 %v528, %v663
    %v665 = vpop.f32.mrb[0].mxu0
    %666 = vmatprep.mubr.bf16.mxu0 0
    %667 = vmatmul.mubr.bf16.gmra.mrb[0].mxu0 %v506
    %v668 = vpop.f32.mrb[0].mxu0
    %v669 = vadd.f32 %v528, %v668
    %v670 = vpop.f32.mrb[0].mxu0
    %v671 = vpop.f32.mrb[0].mxu0
    %v672 = vadd.f32 %v528, %v671
    %v673 = vpop.f32.mrb[0].mxu0
    %674 = vdwg.mxu0
    %675 = vmax.xlane.f32.xlu0 %v613
    %v676 = vpop.xlane.xlu0 %675
    %677 = vmax.xlane.f32.xlu0 %v616
    %v678 = vpop.xlane.xlu0 %677
    %679 = vmax.xlane.f32.xlu0 %v621
    %v680 = vpop.xlane.xlu0 %679
    %681 = vmax.xlane.f32.xlu0 %v624
    %v682 = vpop.xlane.xlu0 %681
    %683 = vmax.xlane.f32.xlu0 %v629
    %v684 = vpop.xlane.xlu0 %683
    %685 = vmax.xlane.f32.xlu0 %v632
    %v686 = vpop.xlane.xlu0 %685
    %687 = vmax.xlane.f32.xlu0 %v637
    %v688 = vpop.xlane.xlu0 %687
    %689 = vmax.xlane.f32.xlu0 %v640
    %v690 = vpop.xlane.xlu0 %689
    %691 = vmax.xlane.f32.xlu0 %v645
    %v692 = vpop.xlane.xlu0 %691
    %693 = vmax.xlane.f32.xlu0 %v648
    %v694 = vpop.xlane.xlu0 %693
    %695 = vmax.xlane.f32.xlu0 %v653
    %v696 = vpop.xlane.xlu0 %695
    %697 = vmax.xlane.f32.xlu0 %v656
    %v698 = vpop.xlane.xlu0 %697
    %699 = vmax.xlane.f32.xlu0 %v661
    %v700 = vpop.xlane.xlu0 %699
    %701 = vmax.xlane.f32.xlu0 %v664
    %v702 = vpop.xlane.xlu0 %701
    %703 = vmax.xlane.f32.xlu0 %v669
    %v704 = vpop.xlane.xlu0 %703
    %705 = vmax.xlane.f32.xlu0 %v672
    %v706 = vpop.xlane.xlu0 %705
    %v707 = vsub.f32 %v613, %v676
    %v708 = vsub.f32 %v616, %v678
    %v709 = vsub.f32 %v621, %v680
    %v710 = vsub.f32 %v624, %v682
    %v711 = vsub.f32 %v629, %v684
    %v712 = vsub.f32 %v632, %v686
    %v713 = vsub.f32 %v637, %v688
    %v714 = vsub.f32 %v640, %v690
    %v715 = vsub.f32 %v645, %v692
    %v716 = vsub.f32 %v648, %v694
    %v717 = vsub.f32 %v653, %v696
    %v718 = vsub.f32 %v656, %v698
    %v719 = vsub.f32 %v661, %v700
    %v720 = vsub.f32 %v664, %v702
    %v721 = vsub.f32 %v669, %v704
    %v722 = vsub.f32 %v672, %v706
    %v723 = vmul.f32 %v707, 1.442695
    %v724 = vpow.pop %v723
    %v725 = vmul.f32 %v708, 1.442695
    %v726 = vpow.pop %v725
    %v727 = vmul.f32 %v709, 1.442695
    %v728 = vpow.pop %v727
    %v729 = vmul.f32 %v710, 1.442695
    %v730 = vpow.pop %v729
    %v731 = vmul.f32 %v711, 1.442695
    %v732 = vpow.pop %v731
    %v733 = vmul.f32 %v712, 1.442695
    %v734 = vpow.pop %v733
    %v735 = vmul.f32 %v713, 1.442695
    %v736 = vpow.pop %v735
    %v737 = vmul.f32 %v714, 1.442695
    %v738 = vpow.pop %v737
    %v739 = vmul.f32 %v715, 1.442695
    %v740 = vpow.pop %v739
    %v741 = vmul.f32 %v716, 1.442695
    %v742 = vpow.pop %v741
    %v743 = vmul.f32 %v717, 1.442695
    %v744 = vpow.pop %v743
    %v745 = vmul.f32 %v718, 1.442695
    %v746 = vpow.pop %v745
    %v747 = vmul.f32 %v719, 1.442695
    %v748 = vpow.pop %v747
    %v749 = vmul.f32 %v720, 1.442695
    %v750 = vpow.pop %v749
    %v751 = vmul.f32 %v721, 1.442695
    %v752 = vpow.pop %v751
    %v753 = vmul.f32 %v722, 1.442695
    %v754 = vpow.pop %v753
    %755 = vadd.xlane.f32.xlu0 %v724
    %v756 = vpop.xlane.xlu0 %755
    %757 = vadd.xlane.f32.xlu0 %v726
    %v758 = vpop.xlane.xlu0 %757
    %759 = vadd.xlane.f32.xlu0 %v728
    %v760 = vpop.xlane.xlu0 %759
    %761 = vadd.xlane.f32.xlu0 %v730
    %v762 = vpop.xlane.xlu0 %761
    %763 = vadd.xlane.f32.xlu0 %v732
    %v764 = vpop.xlane.xlu0 %763
    %765 = vadd.xlane.f32.xlu0 %v734
    %v766 = vpop.xlane.xlu0 %765
    %767 = vadd.xlane.f32.xlu0 %v736
    %v768 = vpop.xlane.xlu0 %767
    %769 = vadd.xlane.f32.xlu0 %v738
    %v770 = vpop.xlane.xlu0 %769
    %771 = vadd.xlane.f32.xlu0 %v740
    %v772 = vpop.xlane.xlu0 %771
    %773 = vadd.xlane.f32.xlu0 %v742
    %v774 = vpop.xlane.xlu0 %773
    %775 = vadd.xlane.f32.xlu0 %v744
    %v776 = vpop.xlane.xlu0 %775
    %777 = vadd.xlane.f32.xlu0 %v746
    %v778 = vpop.xlane.xlu0 %777
    %779 = vadd.xlane.f32.xlu0 %v748
    %v780 = vpop.xlane.xlu0 %779
    %781 = vadd.xlane.f32.xlu0 %v750
    %v782 = vpop.xlane.xlu0 %781
    %783 = vadd.xlane.f32.xlu0 %v752
    %v784 = vpop.xlane.xlu0 %783
    %785 = vadd.xlane.f32.xlu0 %v754
    %v786 = vpop.xlane.xlu0 %785
    %v787 = vrcp.pop %v756
    %v788 = vrcp.pop %v758
    %v789 = vrcp.pop %v760
    %v790 = vrcp.pop %v762
    %v791 = vrcp.pop %v764
    %v792 = vrcp.pop %v766
    %v793 = vrcp.pop %v768
    %v794 = vrcp.pop %v770
    %v795 = vrcp.pop %v772
    %v796 = vrcp.pop %v774
    %v797 = vrcp.pop %v776
    %v798 = vrcp.pop %v778
    %v799 = vrcp.pop %v780
    %v800 = vrcp.pop %v782
    %v801 = vrcp.pop %v784
    %v802 = vrcp.pop %v786
    %v803 = vmul.f32 %v724, %v787
    %v804 = vmul.f32 %v726, %v788
    %v805 = vmul.f32 %v728, %v789
    %v806 = vmul.f32 %v730, %v790
    %v807 = vmul.f32 %v732, %v791
    %v808 = vmul.f32 %v734, %v792
    %v809 = vmul.f32 %v736, %v793
    %v810 = vmul.f32 %v738, %v794
    %v811 = vmul.f32 %v740, %v795
    %v812 = vmul.f32 %v742, %v796
    %v813 = vmul.f32 %v744, %v797
    %v814 = vmul.f32 %v746, %v798
    %v815 = vmul.f32 %v748, %v799
    %v816 = vmul.f32 %v750, %v800
    %v817 = vmul.f32 %v752, %v801
    %v818 = vmul.f32 %v754, %v802
    %819 = vst [vmem:[#allocation9] sm:$0xff] %v803
    %820 = vst [vmem:[#allocation9 + $0x8] sm:$0xff] %v804
    %821 = vst [vmem:[#allocation9 + $0x10] sm:$0xff] %v805
    %822 = vst [vmem:[#allocation9 + $0x18] sm:$0xff] %v806
    %823 = vst [vmem:[#allocation9 + $0x20] sm:$0xff] %v807
    %824 = vst [vmem:[#allocation9 + $0x28] sm:$0xff] %v808
    %825 = vst [vmem:[#allocation9 + $0x30] sm:$0xff] %v809
    %826 = vst [vmem:[#allocation9 + $0x38] sm:$0xff] %v810
    %827 = vst [vmem:[#allocation9 + $0x40] sm:$0xff] %v811
    %828 = vst [vmem:[#allocation9 + $0x48] sm:$0xff] %v812
    %829 = vst [vmem:[#allocation9 + $0x50] sm:$0xff] %v813
    %830 = vst [vmem:[#allocation9 + $0x58] sm:$0xff] %v814
    %831 = vst [vmem:[#allocation9 + $0x60] sm:$0xff] %v815
    %832 = vst [vmem:[#allocation9 + $0x68] sm:$0xff] %v816
    %833 = vst [vmem:[#allocation9 + $0x70] sm:$0xff] %v817
    %834 = vst [vmem:[#allocation9 + $0x78] sm:$0xff] %v818
    // Predicated region
    $region30: #{tpu_custom_call.1} parent=1 // pred_check
      _
    $region31: #{tpu_custom_call.1} parent=1 // pred_check_branch
      %836 = sbr.rel (0) target = $region33
    $region32: #{tpu_custom_call.1} parent=1 // pred_region
      %s838 = ssub.s32 1024, 1024
      %839 = vsyncadd [#allocation4], %s838
      %s840 = sshll.u32 [#allocation8], 4
      %s841 = int_to_ptr.vmem [resolvable:$true] %s840
      %846 = dma.vmem_to_hbm [thread:$0]  %s841, 1024, %s4, [#allocation4], 64, 64, 4
    $region33: #{tpu_custom_call.1} parent=1 // pred_fallthru
      _
    // Predicated region
    $region34: #{tpu_custom_call.1} parent=1 // pred_check
      _
    $region35: #{tpu_custom_call.1} parent=1 // pred_check_branch
      %848 = sbr.rel (0) target = $region37
    $region36: #{tpu_custom_call.1} parent=1 // pred_region
      %s850 = ssub.s32 2048, 2048
      %851 = vsyncadd [#allocation10], %s850
      %s852 = sshll.u32 [#allocation9], 4
      %s853 = int_to_ptr.vmem [resolvable:$true] %s852
      %858 = dma.vmem_to_hbm [thread:$0]  %s853, 2048, %s5, [#allocation10], 128, 128, 8
    $region37: #{tpu_custom_call.1} parent=1 // pred_fallthru
      _
    // Predicated region
    $region38: #{tpu_custom_call.1} parent=1 // pred_check
      _
    $region39: #{tpu_custom_call.1} parent=1 // pred_check_branch
      %860 = sbr.rel (0) target = $region41
    $region40: #{tpu_custom_call.1} parent=1 // pred_region
      %861 = dma.done [#allocation4], 1024
    $region41: #{tpu_custom_call.1} parent=1 // pred_fallthru
      _
    // Predicated region
    $region42: #{tpu_custom_call.1} parent=1 // pred_check
      _
    $region43: #{tpu_custom_call.1} parent=1 // pred_check_branch
      %863 = sbr.rel (0) target = $region45
    $region44: #{tpu_custom_call.1} parent=1 // pred_region
      %864 = dma.done [#allocation10], 2048
    $region45: #{tpu_custom_call.1} parent=1 // pred_fallthru
      _
    %865 = vsyncpa [#allocation3], 1
    %866 = vsyncpa [#allocation6], 1
    %867 = vsyncpa [#allocation4], 1
    %868 = vsyncpa [#allocation10], 1

</llo_original>
